<compile_context>
chip_gen: v5e
topology: v5e:2x2
jax: 0.10.0
libtpu: 0.0.40
codegen_flags: <defaults>
</compile_context>

<pallas_src>
import functools

import jax
import jax.numpy as jnp
from jax import lax
from jax.experimental import pallas as pl
from jax.experimental.pallas import tpu as pltpu

_INV_SQRT2 = 0.7071067811865476  # 1/sqrt(2)


# ----------------------------------------------------------------------------
# Kernel
# ----------------------------------------------------------------------------
def _ffnn_body(x_ref, w1_ref, b1_ref, w2_ref, b2_ref, o_ref, acc_ref):
    """One (row-tile, dff-chunk) grid step. acc_ref may be o_ref itself."""
    k = pl.program_id(1)

    # Fold the fc2 bias into the accumulator initialization.
    @pl.when(k == 0)
    def _init():
        acc_ref[...] = jnp.broadcast_to(
            b2_ref[...].astype(acc_ref.dtype), acc_ref.shape)

    # h_k = x @ W1[:, k-chunk] + b1[k-chunk]   (f32 accumulation on the MXU)
    h = jnp.dot(x_ref[...], w1_ref[...],
                preferred_element_type=jnp.float32) + b1_ref[...]
    # Exact erf-based GELU (torch default), kept in f32.
    # (If VALU-bound at small d_model on v6e/v7x this could run in bf16.)
    h = 0.5 * h * (1.0 + lax.erf(h * _INV_SQRT2))
    # acc += gelu(h_k) @ W2[k-chunk, :]
    acc_ref[...] += jnp.dot(h.astype(w2_ref.dtype), w2_ref[...],
                            preferred_element_type=jnp.float32)

    if acc_ref is not o_ref:  # static (trace-time) branch
        @pl.when(k == pl.num_programs(1) - 1)
        def _finalize():
            o_ref[...] = acc_ref[...].astype(o_ref.dtype)


def _ffnn_kernel_direct(x_ref, w1_ref, b1_ref, w2_ref, b2_ref, o_ref):
    # f32 output: accumulate straight into the k-invariant output block.
    _ffnn_body(x_ref, w1_ref, b1_ref, w2_ref, b2_ref, o_ref, o_ref)


def _ffnn_kernel_scratch(x_ref, w1_ref, b1_ref, w2_ref, b2_ref, o_ref, acc_ref):
    # Narrow output dtype: accumulate in f32 scratch, cast once at the last k.
    _ffnn_body(x_ref, w1_ref, b1_ref, w2_ref, b2_ref, o_ref, acc_ref)


# ----------------------------------------------------------------------------
# Tiling helpers
# ----------------------------------------------------------------------------
def _round_up(x, m):
    return (x + m - 1) // m * m


def _cdiv(a, b):
    return (a + b - 1) // b


def _hw_defaults():
    """Per-generation defaults: (gen, vmem_capacity, block_m, tk_cap, n_cores)."""
    vmem_cap = None
    try:
        vmem_cap = int(pltpu.get_tpu_info().vmem_capacity_bytes)
    except Exception:
        vmem_cap = None
    kind = ""
    try:
        kind = jax.devices()[0].device_kind.lower()
    except Exception:
        kind = ""
    if ("v5e" in kind) or ("v5 lite" in kind) or ("v5lite" in kind):
        gen, block_m, tk_cap, n_cores, dflt = "v5e", 256, 1024, 1, 128 << 20
    elif "v6" in kind:
        gen, block_m, tk_cap, n_cores, dflt = "v6e", 1024, 512, 1, 128 << 20
    elif ("v7" in kind) or ("7x" in kind):
        gen, block_m, tk_cap, n_cores, dflt = "v7x", 512, 512, 2, 64 << 20
    else:  # unknown / v4 / v5p: conservative
        gen, block_m, tk_cap, n_cores, dflt = "unknown", 512, 512, 1, 64 << 20
    if vmem_cap is None:
        vmem_cap = dflt
    return gen, vmem_cap, block_m, tk_cap, n_cores


def _choose_row_tiling(m, target_tm, n_cores):
    """Balanced row tiles: padding waste < 16 rows/tile; even split across cores."""
    target_tm = max(16, (target_tm // 16) * 16)
    n = max(1, _cdiv(m, target_tm))
    if n_cores > 1 and m > 16 * n_cores:
        n = _cdiv(n, n_cores) * n_cores       # row axis shards across TensorCores
    tm = _round_up(_cdiv(m, n), 16)
    return tm, n


def _pick_block_k(dff_p, limit):
    """Largest multiple of 128 dividing dff_p and <= limit; prefer 256-aligned."""
    limit = max(128, min(limit, dff_p))
    best, best256 = 128, None
    t = 128
    while t <= limit:
        if dff_p % t == 0:
            best = t
            if t % 256 == 0:
                best256 = t
        t += 128
    if best256 is not None and 2 * best256 >= best:
        return best256
    return best


# ----------------------------------------------------------------------------
# Builder: pads/casts weights once, returns a jitted apply(x)
# ----------------------------------------------------------------------------
def make_ffnn(w1, b1, w2, b2, *, compute_dtype=jnp.bfloat16,
              block_m=None, block_k_cap=None):
    """w1:(d_model,dff) b1:(dff,) w2:(dff,d_model) b2:(d_model,)."""
    d_model, dff = w1.shape
    assert w2.shape == (dff, d_model)

    _, vmem_cap, hw_block_m, hw_tk_cap, n_cores = _hw_defaults()
    block_m = hw_block_m if block_m is None else block_m
    tk_cap = hw_tk_cap if block_k_cap is None else block_k_cap
    budget = max(vmem_cap - (8 << 20), 16 << 20)   # headroom below physical VMEM

    d_model_p = _round_up(d_model, 128)
    dff_p = _round_up(dff, 128)

    wdtype = compute_dtype if compute_dtype is not None else w1.dtype
    cbytes = jnp.dtype(wdtype).itemsize

    # Pad ONCE, outside the jitted hot path.  Zero padding is exact: padded w1
    # columns give h = 0 (b1 padded with 0), gelu(0)=0, and matching padded w2
    # rows/columns contribute nothing.
    w1p = jnp.pad(w1.astype(wdtype),
                  ((0, d_model_p - d_model), (0, dff_p - dff)))
    w2p = jnp.pad(w2.astype(wdtype),
                  ((0, dff_p - dff), (0, d_model_p - d_model)))
    b1p = jnp.pad(b1.astype(jnp.float32), ((0, dff_p - dff),)).reshape(1, dff_p)
    b2p = jnp.pad(b2.astype(jnp.float32),
                  ((0, d_model_p - d_model),)).reshape(1, d_model_p)

    @jax.jit
    def _apply(x, w1p, b1p, w2p, b2p):
        batch, seq, dm = x.shape
        assert dm == d_model, "d_model mismatch"
        out_dtype = x.dtype
        obytes = jnp.dtype(out_dtype).itemsize
        use_scratch = jnp.dtype(out_dtype) != jnp.dtype(jnp.float32)
        m = batch * seq

        # ---- trace-time tile selection, sized against the VMEM budget ----
        acc_bytes = 4 if use_scratch else 0
        per_row = d_model_p * (2 * cbytes + 2 * obytes + acc_bytes)
        per_tk = 4 * d_model_p * cbytes + 64      # w1 + w2 chunk, double-buffered
        bias2 = 2 * 8 * d_model_p * 4             # b2 tile (double-buffered)

        max_tm = (budget - bias2 - per_tk * 128) // per_row
        max_tm = max(16, (max_tm // 16) * 16)
        tm, n_rows = _choose_row_tiling(m, min(block_m, max_tm), n_cores)
        m_p = n_rows * tm

        fixed = per_row * tm + bias2
        max_tk = max(128, (budget - fixed) // per_tk)
        tk = _pick_block_k(dff_p, min(tk_cap, max_tk))
        n_k = dff_p // tk

        vmem_est = fixed + per_tk * tk
        vmem_limit = int(min(budget, max(int(vmem_est * 1.25), 8 << 20)))

        cost = pl.CostEstimate(
            flops=4 * m_p * d_model_p * dff_p,
            transcendentals=m_p * dff_p,
            bytes_accessed=int(m_p * d_model_p * (cbytes + obytes)
                               + n_rows * (2 * d_model_p * dff_p * cbytes
                                           + 4 * (dff_p + d_model_p))),
        )

        x2d = x.reshape(m, d_model)
        if compute_dtype is not None:
            x2d = x2d.astype(compute_dtype)
        # Padded rows pick up b1/b2 (nonzero garbage) but are sliced off below;
        # padded d_model columns are exact zeros.
        x2d = jnp.pad(x2d, ((0, m_p - m), (0, d_model_p - d_model)))

        kernel = _ffnn_kernel_scratch if use_scratch else _ffnn_kernel_direct
        scratch = ([pltpu.VMEM((tm, d_model_p), jnp.float32)]
                   if use_scratch else [])

        out2d = pl.pallas_call(
            kernel,
            out_shape=jax.ShapeDtypeStruct((m_p, d_model_p), out_dtype),
            grid=(n_rows, n_k),
            in_specs=[
                pl.BlockSpec((tm, d_model_p), lambda i, k: (i, 0)),   # x rows
                pl.BlockSpec((d_model_p, tk), lambda i, k: (0, k)),   # w1 chunk
                pl.BlockSpec((1, tk), lambda i, k: (0, k)),           # b1 chunk
                pl.BlockSpec((tk, d_model_p), lambda i, k: (k, 0)),   # w2 chunk
                pl.BlockSpec((1, d_model_p), lambda i, k: (0, 0)),    # b2 (invariant)
            ],
            out_specs=pl.BlockSpec((tm, d_model_p), lambda i, k: (i, 0)),
            scratch_shapes=scratch,
            compiler_params=pltpu.CompilerParams(
                dimension_semantics=("parallel", "arbitrary"),
                vmem_limit_bytes=vmem_limit,
            ),
            cost_estimate=cost,
        )(x2d, w1p, b1p, w2p, b2p)

        return out2d[:m, :d_model].reshape(batch, seq, d_model)

    def apply(x):
        return _apply(x, w1p, b1p, w2p, b2p)

    return apply


# ----------------------------------------------------------------------------
# Reference + demo
# ----------------------------------------------------------------------------
def _init_params(key, d_model, dff, dtype=jnp.float32):
    """Mirror nn.Linear init: uniform(-1/sqrt(fan_in), +1/sqrt(fan_in))."""
    k1, k2, k3, k4 = jax.random.split(key, 4)
    lim1 = 1.0 / jnp.sqrt(d_model)
    lim2 = 1.0 / jnp.sqrt(dff)
    # stored as (in_features, out_features) — transpose of the torch weight
    w1 = jax.random.uniform(k1, (d_model, dff), dtype, -lim1, lim1)
    b1 = jax.random.uniform(k2, (dff,), dtype, -lim1, lim1)
    w2 = jax.random.uniform(k3, (dff, d_model), dtype, -lim2, lim2)
    b2 = jax.random.uniform(k4, (d_model,), dtype, -lim2, lim2)
    return w1, b1, w2, b2


def _ffnn_ref(x, w1, b1, w2, b2):
    h = x @ w1 + b1
    h = jax.nn.gelu(h, approximate=False)
    return h @ w2 + b2


if __name__ == "__main__":
    batch, seq, d_model, dff = 2, 8, 32, 64

    key = jax.random.PRNGKey(0)
    kx, kp = jax.random.split(key)
    x = jax.random.normal(kx, (batch, seq, d_model), dtype=jnp.float32)
    w1, b1, w2, b2 = _init_params(kp, d_model, dff)

    ref = _ffnn_ref(x, w1, b1, w2, b2)

    # Strict f32 path (f32 output -> direct-accumulate kernel, no scratch).
    apply_f32 = make_ffnn(w1, b1, w2, b2, compute_dtype=jnp.float32)
    out = jax.block_until_ready(apply_f32(x))
    assert out.shape == (batch, seq, d_model)
    assert jnp.allclose(out, ref, atol=1e-4, rtol=1e-4), "f32 mismatch vs reference"

    # Default fast path: bf16 MXU inputs, f32 accumulation, f32 output.
    apply_bf16 = make_ffnn(w1, b1, w2, b2)
    out_bf16 = jax.block_until_ready(apply_bf16(x))
    assert jnp.allclose(out_bf16, ref, atol=1e-1, rtol=1e-1), "bf16 mismatch vs reference"

    # bf16 activations -> bf16 output (exercises the f32-scratch accumulator path).
    out_bf16_io = jax.block_until_ready(apply_bf16(x.astype(jnp.bfloat16)))
    assert out_bf16_io.dtype == jnp.bfloat16
    assert jnp.allclose(out_bf16_io.astype(jnp.float32), ref,
                        atol=1e-1, rtol=1e-1), "bf16-io mismatch vs reference"

    print("KERNEL_OK")
</pallas_src>

<mosaic_0001>
module attributes {stable_mosaic.version = 11 : i64} {
  func.func @_ffnn_kernel_direct(%arg0: i32, %arg1: i32, %arg2: memref<16x128xf32, #tpu.memory_space<vmem>>, %arg3: memref<128x128xf32, #tpu.memory_space<vmem>>, %arg4: memref<1x128xf32, #tpu.memory_space<vmem>>, %arg5: memref<128x128xf32, #tpu.memory_space<vmem>>, %arg6: memref<1x128xf32, #tpu.memory_space<vmem>>, %arg7: memref<16x128xf32, #tpu.memory_space<vmem>>) attributes {dimension_semantics = [#tpu.dimension_semantics<parallel>, #tpu.dimension_semantics<arbitrary>], iteration_bounds = array<i64: 1, 1>, scalar_prefetch = 0 : i64, scratch_operands = 0 : i64, tpu.core_type = #tpu.core_type<tc>, window_params = [{transform_indices = @transform_0, window_bounds = array<i64: 16, 128>}, {transform_indices = @transform_1, window_bounds = array<i64: 128, 128>}, {transform_indices = @transform_2, window_bounds = array<i64: 1, 128>}, {transform_indices = @transform_3, window_bounds = array<i64: 128, 128>}, {pipeline_mode = #tpu.pipeline_mode<synchronous>, transform_indices = @transform_4, window_bounds = array<i64: 1, 128>}, {transform_indices = @transform_5, window_bounds = array<i64: 16, 128>}]} {
    %c0_i32 = arith.constant 0 : i32
    %0 = arith.cmpi eq, %arg1, %c0_i32 : i32
    %1 = arith.extui %0 : i1 to i32
    %c0_i32_0 = arith.constant 0 : i32
    %2 = arith.cmpi ne, %1, %c0_i32_0 : i32
    scf.if %2 {
      %c0_16 = arith.constant 0 : index
      %c0_17 = arith.constant 0 : index
      %22 = vector.load %arg6[%c0_16, %c0_17] : memref<1x128xf32, #tpu.memory_space<vmem>>, vector<1x128xf32>
      %23 = vector.shape_cast %22 : vector<1x128xf32> to vector<1x128xf32>
      %24 = vector.broadcast %23 : vector<1x128xf32> to vector<16x128xf32>
      %c0_18 = arith.constant 0 : index
      %c0_19 = arith.constant 0 : index
      %25 = vector.load %arg7[%c0_18, %c0_19] : memref<16x128xf32, #tpu.memory_space<vmem>>, vector<16x128xf32>
      tpu.vector_store %arg7[%c0_18, %c0_19], %24 {strides = array<i32>} : memref<16x128xf32, #tpu.memory_space<vmem>>, vector<16x128xf32>,
    } else {
    }
    %c0 = arith.constant 0 : index
    %c0_1 = arith.constant 0 : index
    %3 = vector.load %arg2[%c0, %c0_1] : memref<16x128xf32, #tpu.memory_space<vmem>>, vector<16x128xf32>
    %c0_2 = arith.constant 0 : index
    %c0_3 = arith.constant 0 : index
    %4 = vector.load %arg3[%c0_2, %c0_3] : memref<128x128xf32, #tpu.memory_space<vmem>>, vector<128x128xf32>
    %cst = arith.constant dense<0.000000e+00> : vector<16x128xf32>
    %5 = tpu.matmul %3, %4, %cst {dimension_numbers = #tpu.dot_dimension_numbers<[1], [0], [0], [1], [0, 0, 1, 1], [], []>} : vector<16x128xf32>, vector<128x128xf32>, vector<16x128xf32> -> vector<16x128xf32>
    %c0_4 = arith.constant 0 : index
    %c0_5 = arith.constant 0 : index
    %6 = vector.load %arg4[%c0_4, %c0_5] : memref<1x128xf32, #tpu.memory_space<vmem>>, vector<1x128xf32>
    %7 = vector.broadcast %6 : vector<1x128xf32> to vector<16x128xf32>
    %8 = arith.addf %5, %7 : vector<16x128xf32>
    %cst_6 = arith.constant 5.000000e-01 : f32
    %9 = vector.broadcast %cst_6 : f32 to vector<16x128xf32>
    %10 = arith.mulf %9, %8 : vector<16x128xf32>
    %cst_7 = arith.constant 0.707106769 : f32
    %11 = vector.broadcast %cst_7 : f32 to vector<16x128xf32>
    %12 = arith.mulf %8, %11 : vector<16x128xf32>
    %13 = math.erf %12 : vector<16x128xf32>
    %cst_8 = arith.constant 1.000000e+00 : f32
    %14 = vector.broadcast %cst_8 : f32 to vector<16x128xf32>
    %15 = arith.addf %14, %13 : vector<16x128xf32>
    %16 = arith.mulf %10, %15 : vector<16x128xf32>
    %c0_9 = arith.constant 0 : index
    %c0_10 = arith.constant 0 : index
    %17 = vector.load %arg7[%c0_9, %c0_10] : memref<16x128xf32, #tpu.memory_space<vmem>>, vector<16x128xf32>
    %c0_11 = arith.constant 0 : index
    %c0_12 = arith.constant 0 : index
    %18 = vector.load %arg5[%c0_11, %c0_12] : memref<128x128xf32, #tpu.memory_space<vmem>>, vector<128x128xf32>
    %cst_13 = arith.constant dense<0.000000e+00> : vector<16x128xf32>
    %19 = tpu.matmul %16, %18, %cst_13 {dimension_numbers = #tpu.dot_dimension_numbers<[1], [0], [0], [1], [0, 0, 1, 1], [], []>} : vector<16x128xf32>, vector<128x128xf32>, vector<16x128xf32> -> vector<16x128xf32>
    %20 = arith.addf %17, %19 : vector<16x128xf32>
    %c0_14 = arith.constant 0 : index
    %c0_15 = arith.constant 0 : index
    %21 = vector.load %arg7[%c0_14, %c0_15] : memref<16x128xf32, #tpu.memory_space<vmem>>, vector<16x128xf32>
    tpu.vector_store %arg7[%c0_14, %c0_15], %20 {strides = array<i32>} : memref<16x128xf32, #tpu.memory_space<vmem>>, vector<16x128xf32>,
    return
  }
  func.func @transform_0(%arg0: i32, %arg1: i32) -> (i32, i32) {
    %c0_i32 = arith.constant 0 : i32
    %c0_i32_0 = arith.constant 0 : i32
    return %arg0, %c0_i32 : i32, i32
  }
  func.func @transform_1(%arg0: i32, %arg1: i32) -> (i32, i32) {
    %c0_i32 = arith.constant 0 : i32
    %c0_i32_0 = arith.constant 0 : i32
    return %c0_i32, %arg1 : i32, i32
  }
  func.func @transform_2(%arg0: i32, %arg1: i32) -> (i32, i32) {
    %c0_i32 = arith.constant 0 : i32
    %c0_i32_0 = arith.constant 0 : i32
    return %c0_i32, %arg1 : i32, i32
  }
  func.func @transform_3(%arg0: i32, %arg1: i32) -> (i32, i32) {
    %c0_i32 = arith.constant 0 : i32
    %c0_i32_0 = arith.constant 0 : i32
    return %arg1, %c0_i32 : i32, i32
  }
  func.func @transform_4(%arg0: i32, %arg1: i32) -> (i32, i32) {
    %c0_i32 = arith.constant 0 : i32
    %c0_i32_0 = arith.constant 0 : i32
    %c0_i32_1 = arith.constant 0 : i32
    return %c0_i32, %c0_i32_0 : i32, i32
  }
  func.func @transform_5(%arg0: i32, %arg1: i32) -> (i32, i32) {
    %c0_i32 = arith.constant 0 : i32
    %c0_i32_0 = arith.constant 0 : i32
    return %arg0, %c0_i32 : i32, i32
  }
}

</mosaic_0001>

<llo_original>
// kernel: _apply.1
$region0: #{_apply.1}
  #allocation0 [shape = 'u32[]', space=smem, size = 0x4, offset = 0x4, fixed_abs, tag = 'smem constant byte address 0x4 - core index']
  #allocation1 [shape = 'u32[72,128]{1,0:T(1,128)}', space=vmem, size = 0x9000, scoped, tag = 'internal scratch']
  %s0 = inlined_call_operand.vmem [shape: f32[16,128], index: 0, kind: input, shape index: {}]
  %s1 = inlined_call_operand.hbm [shape: f32[128,128], index: 1, kind: input, shape index: {}]
  %s2 = inlined_call_operand.vmem [shape: f32[1,128], index: 2, kind: input, shape index: {}]
  %s3 = inlined_call_operand.hbm [shape: f32[128,128], index: 3, kind: input, shape index: {}]
  %s4 = inlined_call_operand.vmem [shape: f32[1,128], index: 4, kind: input, shape index: {}]
  %s5 = inlined_call_operand.vmem [shape: f32[16,128], index: 5, kind: output, shape index: {}]
  %s6 = sld [smem:[#allocation0]]
  $region42: #{_apply.1} parent=0
    _
  %s8 = ssub.s32 1, %s6
  %s9 = scalar_select 0, %s8, %s6
  $region1: #{_apply.1} parent=0
    #allocation2 [shape = 'u8[65536]{0}', space=vmem, size = 0x10000, scoped, tag = 'input window, operand 1, single buffered']
    #allocation3 [shape = 's32[1]{0}', space=sflag, size = 0x4, scoped, tag = 'scoped memory for _apply.1']
    #allocation4 [shape = 'u8[65536]{0}', space=vmem, size = 0x10000, scoped, tag = 'input window, operand 3, single buffered']
    #allocation5 [shape = 's32[1]{0}', space=sflag, size = 0x4, scoped, tag = 'scoped memory for _apply.1']
    %10 = vsyncpa [#allocation3], 0
    %11 = vsyncpa [#allocation5], 0
    // Predicated region
    $region2: #{_apply.1} parent=1 // pred_check
      _
    $region3: #{_apply.1} parent=1 // pred_check_branch
      %13 = sbr.rel (0) target = $region5
    $region4: #{_apply.1} parent=1 // pred_region
      _
    $region5: #{_apply.1} parent=1 // pred_fallthru
      _
    // Predicated region
    $region6: #{_apply.1} parent=1 // pred_check
      _
    $region7: #{_apply.1} parent=1 // pred_check_branch
      %15 = sbr.rel (0) target = $region9
    $region8: #{_apply.1} parent=1 // pred_region
      %17 = vsyncadd [#allocation3], 0
      %s18 = sshll.u32 %s1, 4
      %s19 = int_to_ptr.hbm [resolvable:$true] %s18
      %s20 = sshll.u32 [#allocation2], 4
      %s21 = int_to_ptr.vmem [resolvable:$true] %s20
      %26 = dma.hbm_to_vmem [thread:$0]  %s19, 2048, %s21, [#allocation3], 128, 128, 8
    $region9: #{_apply.1} parent=1 // pred_fallthru
      _
    // Predicated region
    $region10: #{_apply.1} parent=1 // pred_check
      _
    $region11: #{_apply.1} parent=1 // pred_check_branch
      %28 = sbr.rel (0) target = $region13
    $region12: #{_apply.1} parent=1 // pred_region
      _
    $region13: #{_apply.1} parent=1 // pred_fallthru
      _
    // Predicated region
    $region14: #{_apply.1} parent=1 // pred_check
      _
    $region15: #{_apply.1} parent=1 // pred_check_branch
      %30 = sbr.rel (0) target = $region17
    $region16: #{_apply.1} parent=1 // pred_region
      %32 = vsyncadd [#allocation5], 0
      %s33 = sshll.u32 %s3, 4
      %s34 = int_to_ptr.hbm [resolvable:$true] %s33
      %s35 = sshll.u32 [#allocation4], 4
      %s36 = int_to_ptr.vmem [resolvable:$true] %s35
      %41 = dma.hbm_to_vmem [thread:$0]  %s34, 2048, %s36, [#allocation5], 128, 128, 8
    $region17: #{_apply.1} parent=1 // pred_fallthru
      _
    // Predicated region
    $region18: #{_apply.1} parent=1 // pred_check
      _
    $region19: #{_apply.1} parent=1 // pred_check_branch
      %43 = sbr.rel (0) target = $region21
    $region20: #{_apply.1} parent=1 // pred_region
      _
    $region21: #{_apply.1} parent=1 // pred_fallthru
      _
    // Predicated region
    $region22: #{_apply.1} parent=1 // pred_check
      _
    $region23: #{_apply.1} parent=1 // pred_check_branch
      %45 = sbr.rel (0) target = $region25
    $region24: #{_apply.1} parent=1 // pred_region
      %47 = dma.done [#allocation3], 2048
    $region25: #{_apply.1} parent=1 // pred_fallthru
      _
    // Predicated region
    $region26: #{_apply.1} parent=1 // pred_check
      _
    $region27: #{_apply.1} parent=1 // pred_check_branch
      %49 = sbr.rel (0) target = $region29
    $region28: #{_apply.1} parent=1 // pred_region
      %51 = dma.done [#allocation5], 2048
    $region29: #{_apply.1} parent=1 // pred_fallthru
      _
    %p52 = scmp.eq.s32.totalorder 0, 0
    // Predicated region
    $region30: #{_apply.1} parent=1 // pred_check
      %p53 = pneg %p52
    $region31: #{_apply.1} parent=1 // pred_check_branch
      %55 = sbr.rel (%p53) target = $region33
    $region32: #{_apply.1} parent=1 // pred_region
      %v56 = vld [vmem:[%s4] sm:$0x1]
      %v58 = vperm.slane %v56, 0
      %60 = vst [vmem:[%s5] sm:$0xff] %v58
      %61 = vst [vmem:[%s5 + $0x8] sm:$0xff] %v58
    $region33: #{_apply.1} parent=1 // pred_fallthru
      _
    %v62 = vld [vmem:[%s0] sm:$0xff]
    %v63 = vld [vmem:[%s0 + $0x8] sm:$0xff]
    %v64 = vld [vmem:[#allocation2] sm:$0xff]
    %v65 = vld [vmem:[#allocation2 + $0x8] sm:$0xff]
    %v66 = vld [vmem:[#allocation2 + $0x10] sm:$0xff]
    %v67 = vld [vmem:[#allocation2 + $0x18] sm:$0xff]
    %v68 = vld [vmem:[#allocation2 + $0x20] sm:$0xff]
    %v69 = vld [vmem:[#allocation2 + $0x28] sm:$0xff]
    %v70 = vld [vmem:[#allocation2 + $0x30] sm:$0xff]
    %v71 = vld [vmem:[#allocation2 + $0x38] sm:$0xff]
    %v72 = vld [vmem:[#allocation2 + $0x40] sm:$0xff]
    %v73 = vld [vmem:[#allocation2 + $0x48] sm:$0xff]
    %v74 = vld [vmem:[#allocation2 + $0x50] sm:$0xff]
    %v75 = vld [vmem:[#allocation2 + $0x58] sm:$0xff]
    %v76 = vld [vmem:[#allocation2 + $0x60] sm:$0xff]
    %v77 = vld [vmem:[#allocation2 + $0x68] sm:$0xff]
    %v78 = vld [vmem:[#allocation2 + $0x70] sm:$0xff]
    %v79 = vld [vmem:[#allocation2 + $0x78] sm:$0xff]
    %v80 = vld [vmem:[%s2] sm:$0x1]
    %v82 = vperm.slane %v80, 0
    %84 = vmatpush.msra.mxu0 %v79
    %85 = vmatpush.msra.mxu0 %v78
    %86 = vmatpush.msra.mxu0 %v77
    %87 = vmatpush.msra.mxu0 %v76
    %88 = vmatpush.msra.mxu0 %v75
    %89 = vmatpush.msra.mxu0 %v74
    %90 = vmatpush.msra.mxu0 %v73
    %91 = vmatpush.msra.mxu0 %v72
    %92 = vmatpush.msra.mxu0 %v71
    %93 = vmatpush.msra.mxu0 %v70
    %94 = vmatpush.msra.mxu0 %v69
    %95 = vmatpush.msra.mxu0 %v68
    %96 = vmatpush.msra.mxu0 %v67
    %97 = vmatpush.msra.mxu0 %v66
    %98 = vmatpush.msra.mxu0 %v65
    %99 = vmatpush.msra.mxu0 %v64
    %100 = vmatmul.f32.gmra.mxu0 %v62
    %v101 = vpop.f32.mrf.mxu0
    %v102 = vadd.f32 %v82, %v101
    %103 = vmatmul.f32.gmra.mxu0 %v63
    %v104 = vpop.f32.mrf.mxu0
    %v105 = vadd.f32 %v82, %v104
    %106 = vdwg.mxu0
    %v107 = vmul.f32 %v102, 0.5
    %v108 = vmul.f32 %v105, 0.5
    %v109 = vmul.f32 %v102, 0.70710677
    %v110 = vmul.f32 %v105, 0.70710677
    %v111 = vmul.f32 %v109, %v109
    %v112 = vmin.f32 16.0, %v111
    %v113 = vmul.f32 %v112, 2.1237322e-06
    %v114 = vadd.f32 %v113, 0.00028619796
    %v115 = vmul.f32 %v112, %v114
    %v116 = vadd.f32 %v115, 0.0036580483
    %v117 = vmul.f32 %v112, %v116
    %v118 = vadd.f32 %v117, 0.05243302
    %v119 = vmul.f32 %v112, %v118
    %v120 = vadd.f32 %v119, 0.18741608
    %v121 = vmul.f32 %v112, %v120
    %v122 = vadd.f32 %v121, 1.1283791
    %v123 = vmul.f32 %v109, %v122
    %v124 = vmul.f32 %v112, 3.8918573e-05
    %v125 = vadd.f32 %v124, 0.001143296
    %v126 = vmul.f32 %v112, %v125
    %v127 = vadd.f32 %v126, 0.014752088
    %v128 = vmul.f32 %v112, %v127
    %v129 = vadd.f32 %v128, 0.112945676
    %v130 = vmul.f32 %v112, %v129
    %v131 = vadd.f32 %v130, 0.4994258
    %v132 = vmul.f32 %v112, %v131
    %v133 = vadd.f32 %v132, 1.0
    %v134 = vrcp.pop %v133
    %v135 = vmul.f32 %v133, %v134
    %v136 = vsub.f32 1.0, %v135
    %v137 = vmul.f32 %v134, %v136
    %v138 = vadd.f32 %v134, %v137
    %vm139 = vweird.f32 %v133
    %vm140 = vweird.f32 %v134
    %vm141 = vmor %vm139, %vm140
    %v142 = vsel %vm141, %v134, %v138
    %v143 = vand.u32 2147483647, %v133
    %vm144 = vcmp.eq.f32.partialorder %v143, 8.507059e+37
    %v145 = vand.u32 %v133, 2147483648
    %v146 = vor.u32 1.1754944e-38, %v145
    %v147 = vsel %vm144, %v146, %v142
    %v148 = vmul.f32 %v123, %v147
    %v149 = vmin.f32 %v148, 1.0
    %v150 = vmax.f32 %v149, -1.0
    %v151 = vmul.f32 %v110, %v110
    %v152 = vmin.f32 16.0, %v151
    %v153 = vmul.f32 %v152, 2.1237322e-06
    %v154 = vadd.f32 %v153, 0.00028619796
    %v155 = vmul.f32 %v152, %v154
    %v156 = vadd.f32 %v155, 0.0036580483
    %v157 = vmul.f32 %v152, %v156
    %v158 = vadd.f32 %v157, 0.05243302
    %v159 = vmul.f32 %v152, %v158
    %v160 = vadd.f32 %v159, 0.18741608
    %v161 = vmul.f32 %v152, %v160
    %v162 = vadd.f32 %v161, 1.1283791
    %v163 = vmul.f32 %v110, %v162
    %v164 = vmul.f32 %v152, 3.8918573e-05
    %v165 = vadd.f32 %v164, 0.001143296
    %v166 = vmul.f32 %v152, %v165
    %v167 = vadd.f32 %v166, 0.014752088
    %v168 = vmul.f32 %v152, %v167
    %v169 = vadd.f32 %v168, 0.112945676
    %v170 = vmul.f32 %v152, %v169
    %v171 = vadd.f32 %v170, 0.4994258
    %v172 = vmul.f32 %v152, %v171
    %v173 = vadd.f32 %v172, 1.0
    %v174 = vrcp.pop %v173
    %v175 = vmul.f32 %v173, %v174
    %v176 = vsub.f32 1.0, %v175
    %v177 = vmul.f32 %v174, %v176
    %v178 = vadd.f32 %v174, %v177
    %vm179 = vweird.f32 %v173
    %vm180 = vweird.f32 %v174
    %vm181 = vmor %vm179, %vm180
    %v182 = vsel %vm181, %v174, %v178
    %v183 = vand.u32 2147483647, %v173
    %vm184 = vcmp.eq.f32.partialorder %v183, 8.507059e+37
    %v185 = vand.u32 %v173, 2147483648
    %v186 = vor.u32 1.1754944e-38, %v185
    %v187 = vsel %vm184, %v186, %v182
    %v188 = vmul.f32 %v163, %v187
    %v189 = vmin.f32 %v188, 1.0
    %v190 = vmax.f32 %v189, -1.0
    %v191 = vadd.f32 %v150, 1.0
    %v192 = vadd.f32 %v190, 1.0
    %v193 = vmul.f32 %v107, %v191
    %v194 = vmul.f32 %v108, %v192
    %v195 = vld [vmem:[%s5] sm:$0xff]
    %v196 = vld [vmem:[%s5 + $0x8] sm:$0xff]
    %v197 = vld [vmem:[#allocation4] sm:$0xff]
    %v198 = vld [vmem:[#allocation4 + $0x8] sm:$0xff]
    %v199 = vld [vmem:[#allocation4 + $0x10] sm:$0xff]
    %v200 = vld [vmem:[#allocation4 + $0x18] sm:$0xff]
    %v201 = vld [vmem:[#allocation4 + $0x20] sm:$0xff]
    %v202 = vld [vmem:[#allocation4 + $0x28] sm:$0xff]
    %v203 = vld [vmem:[#allocation4 + $0x30] sm:$0xff]
    %v204 = vld [vmem:[#allocation4 + $0x38] sm:$0xff]
    %v205 = vld [vmem:[#allocation4 + $0x40] sm:$0xff]
    %v206 = vld [vmem:[#allocation4 + $0x48] sm:$0xff]
    %v207 = vld [vmem:[#allocation4 + $0x50] sm:$0xff]
    %v208 = vld [vmem:[#allocation4 + $0x58] sm:$0xff]
    %v209 = vld [vmem:[#allocation4 + $0x60] sm:$0xff]
    %v210 = vld [vmem:[#allocation4 + $0x68] sm:$0xff]
    %v211 = vld [vmem:[#allocation4 + $0x70] sm:$0xff]
    %v212 = vld [vmem:[#allocation4 + $0x78] sm:$0xff]
    %213 = vmatpush.msra.mxu0 %v212
    %214 = vmatpush.msra.mxu0 %v211
    %215 = vmatpush.msra.mxu0 %v210
    %216 = vmatpush.msra.mxu0 %v209
    %217 = vmatpush.msra.mxu0 %v208
    %218 = vmatpush.msra.mxu0 %v207
    %219 = vmatpush.msra.mxu0 %v206
    %220 = vmatpush.msra.mxu0 %v205
    %221 = vmatpush.msra.mxu0 %v204
    %222 = vmatpush.msra.mxu0 %v203
    %223 = vmatpush.msra.mxu0 %v202
    %224 = vmatpush.msra.mxu0 %v201
    %225 = vmatpush.msra.mxu0 %v200
    %226 = vmatpush.msra.mxu0 %v199
    %227 = vmatpush.msra.mxu0 %v198
    %228 = vmatpush.msra.mxu0 %v197
    %229 = vmatmul.f32.gmra.mxu0 %v193
    %v230 = vpop.f32.mrf.mxu0
    %v231 = vadd.f32 0.0, %v230
    %232 = vmatmul.f32.gmra.mxu0 %v194
    %v233 = vpop.f32.mrf.mxu0
    %v234 = vadd.f32 0.0, %v233
    %235 = vdwg.mxu0
    %v236 = vadd.f32 %v195, %v231
    %v237 = vadd.f32 %v196, %v234
    %238 = vst [vmem:[%s5] sm:$0xff] %v236
    %239 = vst [vmem:[%s5 + $0x8] sm:$0xff] %v237
    // Predicated region
    $region34: #{_apply.1} parent=1 // pred_check
      _
    $region35: #{_apply.1} parent=1 // pred_check_branch
      %241 = sbr.rel (0) target = $region37
    $region36: #{_apply.1} parent=1 // pred_region
      _
    $region37: #{_apply.1} parent=1 // pred_fallthru
      _
    // Predicated region
    $region38: #{_apply.1} parent=1 // pred_check
      _
    $region39: #{_apply.1} parent=1 // pred_check_branch
      %243 = sbr.rel (0) target = $region41
    $region40: #{_apply.1} parent=1 // pred_region
      _
    $region41: #{_apply.1} parent=1 // pred_fallthru
      _
    %244 = vsyncpa [#allocation3], 1
    %245 = vsyncpa [#allocation5], 1

</llo_original>
